<compile_context>
chip_gen: v7x
topology: tpu7x:2x2x1
jax: 0.10.0
libtpu: 0.0.40
codegen_flags: <defaults>
</compile_context>

<pallas_src>
import jax
import jax.numpy as jnp
from jax.experimental import pallas as pl
from jax.experimental.pallas import tpu as pltpu

NUM_INPUTS = 31
NUM_OUTPUTS = 1
HIDDEN = [100, 50, 20]
MIN_TILE = 16  # bf16 sublane packing: 16 rows per vreg sublane group.


def _round_up(n, m):
    return ((n + m - 1) // m) * m


def cancer_mlp_kernel(x_ref, w1_ref, b1_ref, w2_ref, b2_ref, w3_ref, b3_ref,
                      w4_ref, b4_ref, out_ref):
    # Layers 1-3 on the MXU: bf16 operands, f32 accumulation; bias/ReLU in f32.
    h = jnp.dot(x_ref[...], w1_ref[...], preferred_element_type=jnp.float32)
    h = jnp.maximum(h + b1_ref[...], 0.0)
    h = jnp.dot(h.astype(jnp.bfloat16), w2_ref[...],
                preferred_element_type=jnp.float32)
    h = jnp.maximum(h + b2_ref[...], 0.0)
    h = jnp.dot(h.astype(jnp.bfloat16), w3_ref[...],
                preferred_element_type=jnp.float32)
    h = jnp.maximum(h + b3_ref[...], 0.0)
    # Layer 4: Linear(20 -> 1) off the MXU (VPU multiply + cross-lane reduce).
    # w4_ref is the (1, 20) row-form of the (20, 1) weight; all f32.
    logits = jnp.sum(h * w4_ref[...], axis=-1, keepdims=True) + b4_ref[...]
    # Sigmoid on the EUP path: exp + approximate reciprocal (idle slot).
    # NOTE: approx reciprocal has ~1e-4 rel err; probs may exceed [0,1] by ~eps.
    probs = pl.reciprocal(1.0 + jnp.exp(-logits), approx=True)
    # Single packed (tile_m, 2) store: column 0 = logits, column 1 = probs.
    col = jax.lax.broadcasted_iota(jnp.int32, (out_ref.shape[0], 2), 1)
    out_ref[...] = jnp.where(col == 0, logits, probs)


def cancer_mlp_forward(x, params, tile_m=4096):
    """params = (w1, b1, w2, b2, w3, b3, w4, b4) in f32; returns (logits, probs)."""
    batch = x.shape[0]
    w1, b1, w2, b2, w3, b3, w4, b4 = params

    # Cast MXU operands to bf16 *outside* the kernel (one XLA cast, and the
    # dominant x HBM stream halves).  Biases + the final 20->1 weight stay f32.
    x_bf = x.astype(jnp.bfloat16)
    w4_row = jnp.reshape(w4, (NUM_OUTPUTS, HIDDEN[-1]))  # (20,1) -> (1,20)
    kernel_params = (w1.astype(jnp.bfloat16), b1,
                     w2.astype(jnp.bfloat16), b2,
                     w3.astype(jnp.bfloat16), b3,
                     w4_row, b4)

    # Tile sizing: multiples of 16 rows (bf16 packing); as large as possible
    # (per-step overhead ~0.35us), but guarantee >= 2 grid steps when the batch
    # allows it so both v7x TensorCores get work.
    max_tile = _round_up(max(batch, MIN_TILE), MIN_TILE)
    tile_m = min(_round_up(max(tile_m, MIN_TILE), MIN_TILE), max_tile)
    if tile_m >= max_tile and batch > MIN_TILE:
        tile_m = _round_up((max_tile + 1) // 2, MIN_TILE)
    padded_batch = _round_up(batch, tile_m)
    if padded_batch != batch:
        x_bf = jnp.pad(x_bf, ((0, padded_batch - batch), (0, 0)))
    grid = (padded_batch // tile_m,)

    # Weights/biases: full-array blocks, constant block index -> stay resident.
    weight_specs = [pl.BlockSpec(p.shape, lambda i: (0, 0)) for p in kernel_params]
    in_specs = [pl.BlockSpec((tile_m, NUM_INPUTS), lambda i: (i, 0))] + weight_specs
    out_spec = pl.BlockSpec((tile_m, 2), lambda i: (i, 0))

    dims = [NUM_INPUTS] + HIDDEN + [NUM_OUTPUTS]
    flops = 2 * padded_batch * sum(a * b for a, b in zip(dims[:-1], dims[1:]))
    param_bytes = sum(int(p.size) * p.dtype.itemsize for p in kernel_params)
    bytes_accessed = (padded_batch * NUM_INPUTS * 2      # x stream (bf16, dominant)
                      + param_bytes                      # weights/biases
                      + padded_batch * 2 * 4)            # packed f32 output
    cost = pl.CostEstimate(flops=flops,
                           transcendentals=2 * padded_batch,  # exp + recip
                           bytes_accessed=bytes_accessed)

    fn = pl.pallas_call(
        cancer_mlp_kernel,
        out_shape=jax.ShapeDtypeStruct((padded_batch, 2), jnp.float32),
        grid=grid,
        in_specs=in_specs,
        out_specs=out_spec,
        compiler_params=pltpu.CompilerParams(
            dimension_semantics=("parallel",)),
        cost_estimate=cost,
    )
    out = fn(x_bf, *kernel_params)[:batch]
    return out[:, 0:1], out[:, 1:2]


def init_params(key):
    """Deterministic PyTorch-style init: U(-1/sqrt(fan_in), 1/sqrt(fan_in))."""
    dims = [NUM_INPUTS] + HIDDEN + [NUM_OUTPUTS]
    params = []
    for i in range(len(dims) - 1):
        fan_in, fan_out = dims[i], dims[i + 1]
        key, kw, kb = jax.random.split(key, 3)
        bound = 1.0 / (fan_in ** 0.5)
        w = jax.random.uniform(kw, (fan_in, fan_out), jnp.float32, -bound, bound)
        b = jax.random.uniform(kb, (1, fan_out), jnp.float32, -bound, bound)
        params += [w, b]
    return tuple(params)


def reference_forward(x, params):
    w1, b1, w2, b2, w3, b3, w4, b4 = params
    h = jnp.maximum(x @ w1 + b1, 0.0)
    h = jnp.maximum(h @ w2 + b2, 0.0)
    h = jnp.maximum(h @ w3 + b3, 0.0)
    logits = h @ w4 + b4
    return logits, jax.nn.sigmoid(logits)


if __name__ == "__main__":
    key = jax.random.PRNGKey(0)
    key, kx = jax.random.split(key)
    batch = 8
    x = jax.random.normal(kx, (batch, NUM_INPUTS), dtype=jnp.float32)
    params = init_params(key)

    logits, probs = cancer_mlp_forward(x, params)
    jax.block_until_ready((logits, probs))

    ref_logits, ref_probs = reference_forward(x, params)
    assert logits.shape == (batch, NUM_OUTPUTS)
    assert probs.shape == (batch, NUM_OUTPUTS)
    # Loose tolerances: bf16 MXU operands (~1e-2..1e-3 rel err on logits) and
    # the approximate EUP reciprocal on probs. Reference is full f32.
    assert jnp.allclose(logits, ref_logits, atol=5e-2, rtol=5e-2)
    assert jnp.allclose(probs, ref_probs, atol=2e-2, rtol=5e-2)

    # Multi-step gridded + padded path (batch not a multiple of the tile,
    # grid length 3, parallel batch axis).
    key, kx2 = jax.random.split(key)
    x2 = jax.random.normal(kx2, (300, NUM_INPUTS), dtype=jnp.float32)
    logits2, probs2 = cancer_mlp_forward(x2, params, tile_m=128)
    jax.block_until_ready((logits2, probs2))
    ref_logits2, ref_probs2 = reference_forward(x2, params)
    assert logits2.shape == (300, NUM_OUTPUTS)
    assert probs2.shape == (300, NUM_OUTPUTS)
    assert jnp.allclose(logits2, ref_logits2, atol=5e-2, rtol=5e-2)
    assert jnp.allclose(probs2, ref_probs2, atol=2e-2, rtol=5e-2)

    # Default-tile path: tile is auto-capped to half the (padded) batch so the
    # grid has 2 steps (both v7x TensorCores busy).
    logits3, probs3 = cancer_mlp_forward(x2, params)
    jax.block_until_ready((logits3, probs3))
    assert jnp.allclose(logits3, ref_logits2, atol=5e-2, rtol=5e-2)
    assert jnp.allclose(probs3, ref_probs2, atol=2e-2, rtol=5e-2)

    print("KERNEL_OK")
</pallas_src>

<mosaic_0001>
module attributes {stable_mosaic.version = 11 : i64} {
  func.func @cancer_mlp_kernel(%arg0: i32, %arg1: memref<16x31xbf16, #tpu.memory_space<vmem>>, %arg2: memref<31x100xbf16, #tpu.memory_space<vmem>>, %arg3: memref<1x100xf32, #tpu.memory_space<vmem>>, %arg4: memref<100x50xbf16, #tpu.memory_space<vmem>>, %arg5: memref<1x50xf32, #tpu.memory_space<vmem>>, %arg6: memref<50x20xbf16, #tpu.memory_space<vmem>>, %arg7: memref<1x20xf32, #tpu.memory_space<vmem>>, %arg8: memref<1x20xf32, #tpu.memory_space<vmem>>, %arg9: memref<1x1xf32, #tpu.memory_space<vmem>>, %arg10: memref<16x2xf32, #tpu.memory_space<vmem>>) attributes {dimension_semantics = [#tpu.dimension_semantics<parallel>], iteration_bounds = array<i64: 1>, scalar_prefetch = 0 : i64, scratch_operands = 0 : i64, tpu.core_type = #tpu.core_type<tc>, window_params = [{transform_indices = @transform_0, window_bounds = array<i64: 16, 31>}, {pipeline_mode = #tpu.pipeline_mode<synchronous>, transform_indices = @transform_1, window_bounds = array<i64: 31, 100>}, {pipeline_mode = #tpu.pipeline_mode<synchronous>, transform_indices = @transform_2, window_bounds = array<i64: 1, 100>}, {pipeline_mode = #tpu.pipeline_mode<synchronous>, transform_indices = @transform_3, window_bounds = array<i64: 100, 50>}, {pipeline_mode = #tpu.pipeline_mode<synchronous>, transform_indices = @transform_4, window_bounds = array<i64: 1, 50>}, {pipeline_mode = #tpu.pipeline_mode<synchronous>, transform_indices = @transform_5, window_bounds = array<i64: 50, 20>}, {pipeline_mode = #tpu.pipeline_mode<synchronous>, transform_indices = @transform_6, window_bounds = array<i64: 1, 20>}, {pipeline_mode = #tpu.pipeline_mode<synchronous>, transform_indices = @transform_7, window_bounds = array<i64: 1, 20>}, {pipeline_mode = #tpu.pipeline_mode<synchronous>, transform_indices = @transform_8, window_bounds = array<i64: 1, 1>}, {transform_indices = @transform_9, window_bounds = array<i64: 16, 2>}]} {
    %c0 = arith.constant 0 : index
    %c0_0 = arith.constant 0 : index
    %0 = vector.load %arg1[%c0, %c0_0] : memref<16x31xbf16, #tpu.memory_space<vmem>>, vector<16x31xbf16>
    %c0_1 = arith.constant 0 : index
    %c0_2 = arith.constant 0 : index
    %1 = vector.load %arg2[%c0_1, %c0_2] : memref<31x100xbf16, #tpu.memory_space<vmem>>, vector<31x100xbf16>
    %cst = arith.constant dense<0.000000e+00> : vector<16x100xf32>
    %2 = tpu.matmul %0, %1, %cst {dimension_numbers = #tpu.dot_dimension_numbers<[1], [0], [0], [1], [0, 0, 1, 1], [], []>} : vector<16x31xbf16>, vector<31x100xbf16>, vector<16x100xf32> -> vector<16x100xf32>
    %c0_3 = arith.constant 0 : index
    %c0_4 = arith.constant 0 : index
    %3 = vector.load %arg3[%c0_3, %c0_4] : memref<1x100xf32, #tpu.memory_space<vmem>>, vector<1x100xf32>
    %4 = vector.broadcast %3 : vector<1x100xf32> to vector<16x100xf32>
    %5 = arith.addf %2, %4 : vector<16x100xf32>
    %cst_5 = arith.constant 0.000000e+00 : f32
    %6 = vector.broadcast %cst_5 : f32 to vector<16x100xf32>
    %7 = arith.maximumf %5, %6 : vector<16x100xf32>
    %8 = arith.truncf %7 : vector<16x100xf32> to vector<16x100xbf16>
    %c0_6 = arith.constant 0 : index
    %c0_7 = arith.constant 0 : index
    %9 = vector.load %arg4[%c0_6, %c0_7] : memref<100x50xbf16, #tpu.memory_space<vmem>>, vector<100x50xbf16>
    %cst_8 = arith.constant dense<0.000000e+00> : vector<16x50xf32>
    %10 = tpu.matmul %8, %9, %cst_8 {dimension_numbers = #tpu.dot_dimension_numbers<[1], [0], [0], [1], [0, 0, 1, 1], [], []>} : vector<16x100xbf16>, vector<100x50xbf16>, vector<16x50xf32> -> vector<16x50xf32>
    %c0_9 = arith.constant 0 : index
    %c0_10 = arith.constant 0 : index
    %11 = vector.load %arg5[%c0_9, %c0_10] : memref<1x50xf32, #tpu.memory_space<vmem>>, vector<1x50xf32>
    %12 = vector.broadcast %11 : vector<1x50xf32> to vector<16x50xf32>
    %13 = arith.addf %10, %12 : vector<16x50xf32>
    %cst_11 = arith.constant 0.000000e+00 : f32
    %14 = vector.broadcast %cst_11 : f32 to vector<16x50xf32>
    %15 = arith.maximumf %13, %14 : vector<16x50xf32>
    %16 = arith.truncf %15 : vector<16x50xf32> to vector<16x50xbf16>
    %c0_12 = arith.constant 0 : index
    %c0_13 = arith.constant 0 : index
    %17 = vector.load %arg6[%c0_12, %c0_13] : memref<50x20xbf16, #tpu.memory_space<vmem>>, vector<50x20xbf16>
    %cst_14 = arith.constant dense<0.000000e+00> : vector<16x20xf32>
    %18 = tpu.matmul %16, %17, %cst_14 {dimension_numbers = #tpu.dot_dimension_numbers<[1], [0], [0], [1], [0, 0, 1, 1], [], []>} : vector<16x50xbf16>, vector<50x20xbf16>, vector<16x20xf32> -> vector<16x20xf32>
    %c0_15 = arith.constant 0 : index
    %c0_16 = arith.constant 0 : index
    %19 = vector.load %arg7[%c0_15, %c0_16] : memref<1x20xf32, #tpu.memory_space<vmem>>, vector<1x20xf32>
    %20 = vector.broadcast %19 : vector<1x20xf32> to vector<16x20xf32>
    %21 = arith.addf %18, %20 : vector<16x20xf32>
    %cst_17 = arith.constant 0.000000e+00 : f32
    %22 = vector.broadcast %cst_17 : f32 to vector<16x20xf32>
    %23 = arith.maximumf %21, %22 : vector<16x20xf32>
    %c0_18 = arith.constant 0 : index
    %c0_19 = arith.constant 0 : index
    %24 = vector.load %arg8[%c0_18, %c0_19] : memref<1x20xf32, #tpu.memory_space<vmem>>, vector<1x20xf32>
    %25 = vector.broadcast %24 : vector<1x20xf32> to vector<16x20xf32>
    %26 = arith.mulf %23, %25 : vector<16x20xf32>
    %cst_20 = arith.constant dense<0.000000e+00> : vector<16xf32>
    %27 = vector.multi_reduction <add>, %26, %cst_20 [1] : vector<16x20xf32> to vector<16xf32>
    %28 = vector.shape_cast %27 : vector<16xf32> to vector<16x1xf32>
    %c0_21 = arith.constant 0 : index
    %c0_22 = arith.constant 0 : index
    %29 = vector.load %arg9[%c0_21, %c0_22] : memref<1x1xf32, #tpu.memory_space<vmem>>, vector<1x1xf32>
    %30 = vector.broadcast %29 : vector<1x1xf32> to vector<16x1xf32>
    %31 = arith.addf %28, %30 : vector<16x1xf32>
    %cst_23 = arith.constant 0.000000e+00 : f32
    %32 = vector.broadcast %cst_23 : f32 to vector<16x1xf32>
    %33 = arith.subf %32, %31 : vector<16x1xf32>
    %34 = math.exp %33 : vector<16x1xf32>
    %cst_24 = arith.constant 1.000000e+00 : f32
    %35 = vector.broadcast %cst_24 : f32 to vector<16x1xf32>
    %36 = arith.addf %35, %34 : vector<16x1xf32>
    %37 = tpu.reciprocal %36 {approx = true} : vector<16x1xf32> -> vector<16x1xf32>
    %38 = tpu.iota {dimensions = array<i32: 1>} : vector<16x2xi32>
    %c0_i32 = arith.constant 0 : i32
    %39 = vector.broadcast %c0_i32 : i32 to vector<16x2xi32>
    %40 = arith.cmpi eq, %38, %39 : vector<16x2xi32>
    %41 = vector.shape_cast %31 : vector<16x1xf32> to vector<16x1xf32>
    %42 = vector.broadcast %41 : vector<16x1xf32> to vector<16x2xf32>
    %43 = vector.shape_cast %37 : vector<16x1xf32> to vector<16x1xf32>
    %44 = vector.broadcast %43 : vector<16x1xf32> to vector<16x2xf32>
    %45 = arith.select %40, %42, %44 : vector<16x2xi1>, vector<16x2xf32>
    %c0_25 = arith.constant 0 : index
    %c0_26 = arith.constant 0 : index
    %46 = vector.load %arg10[%c0_25, %c0_26] : memref<16x2xf32, #tpu.memory_space<vmem>>, vector<16x2xf32>
    tpu.vector_store %arg10[%c0_25, %c0_26], %45 {strides = array<i32>} : memref<16x2xf32, #tpu.memory_space<vmem>>, vector<16x2xf32>,
    return
  }
  func.func @transform_0(%arg0: i32) -> (i32, i32) {
    %c0_i32 = arith.constant 0 : i32
    %c0_i32_0 = arith.constant 0 : i32
    return %arg0, %c0_i32 : i32, i32
  }
  func.func @transform_1(%arg0: i32) -> (i32, i32) {
    %c0_i32 = arith.constant 0 : i32
    %c0_i32_0 = arith.constant 0 : i32
    %c0_i32_1 = arith.constant 0 : i32
    return %c0_i32, %c0_i32_0 : i32, i32
  }
  func.func @transform_2(%arg0: i32) -> (i32, i32) {
    %c0_i32 = arith.constant 0 : i32
    %c0_i32_0 = arith.constant 0 : i32
    %c0_i32_1 = arith.constant 0 : i32
    return %c0_i32, %c0_i32_0 : i32, i32
  }
  func.func @transform_3(%arg0: i32) -> (i32, i32) {
    %c0_i32 = arith.constant 0 : i32
    %c0_i32_0 = arith.constant 0 : i32
    %c0_i32_1 = arith.constant 0 : i32
    return %c0_i32, %c0_i32_0 : i32, i32
  }
  func.func @transform_4(%arg0: i32) -> (i32, i32) {
    %c0_i32 = arith.constant 0 : i32
    %c0_i32_0 = arith.constant 0 : i32
    %c0_i32_1 = arith.constant 0 : i32
    return %c0_i32, %c0_i32_0 : i32, i32
  }
  func.func @transform_5(%arg0: i32) -> (i32, i32) {
    %c0_i32 = arith.constant 0 : i32
    %c0_i32_0 = arith.constant 0 : i32
    %c0_i32_1 = arith.constant 0 : i32
    return %c0_i32, %c0_i32_0 : i32, i32
  }
  func.func @transform_6(%arg0: i32) -> (i32, i32) {
    %c0_i32 = arith.constant 0 : i32
    %c0_i32_0 = arith.constant 0 : i32
    %c0_i32_1 = arith.constant 0 : i32
    return %c0_i32, %c0_i32_0 : i32, i32
  }
  func.func @transform_7(%arg0: i32) -> (i32, i32) {
    %c0_i32 = arith.constant 0 : i32
    %c0_i32_0 = arith.constant 0 : i32
    %c0_i32_1 = arith.constant 0 : i32
    return %c0_i32, %c0_i32_0 : i32, i32
  }
  func.func @transform_8(%arg0: i32) -> (i32, i32) {
    %c0_i32 = arith.constant 0 : i32
    %c0_i32_0 = arith.constant 0 : i32
    %c0_i32_1 = arith.constant 0 : i32
    return %c0_i32, %c0_i32_0 : i32, i32
  }
  func.func @transform_9(%arg0: i32) -> (i32, i32) {
    %c0_i32 = arith.constant 0 : i32
    %c0_i32_0 = arith.constant 0 : i32
    return %arg0, %c0_i32 : i32, i32
  }
}

</mosaic_0001>

<llo_original>
// kernel: tpu_custom_call.1
$region0: #{tpu_custom_call.1}
  #allocation0 [shape = 'u32[]', space=smem, size = 0x4, offset = 0x4, fixed_abs, tag = 'smem constant byte address 0x4 - core index']
  #allocation1 [shape = 'u32[144,128]{1,0:T(1,128)}', space=vmem, size = 0x12000, scoped, tag = 'internal scratch']
  #allocation2 [shape = 'f32[1,1]{1,0:T(1,128)S(1)}', space=vmem, size = 0x200, scoped, tag = 'scoped memory for tpu_custom_call.1']
  %s0 = inlined_call_operand.vmem [shape: bf16[16,31], index: 0, kind: input, shape index: {}]
  %s1 = inlined_call_operand.vmem [shape: bf16[31,100], index: 1, kind: input, shape index: {}]
  %s2 = inlined_call_operand.vmem [shape: f32[1,100], index: 2, kind: input, shape index: {}]
  %s3 = inlined_call_operand.vmem [shape: bf16[100,50], index: 3, kind: input, shape index: {}]
  %s4 = inlined_call_operand.vmem [shape: f32[1,50], index: 4, kind: input, shape index: {}]
  %s5 = inlined_call_operand.vmem [shape: bf16[50,20], index: 5, kind: input, shape index: {}]
  %s6 = inlined_call_operand.vmem [shape: f32[1,20], index: 6, kind: input, shape index: {}]
  %s7 = inlined_call_operand.vmem [shape: f32[1,20], index: 7, kind: input, shape index: {}]
  %s8 = inlined_call_operand.<no memory space> [shape: f32[1,1], index: 8, kind: input, shape index: {}]
  %s9 = inlined_call_operand.vmem [shape: f32[16,2], index: 9, kind: output, shape index: {}]
  %s10 = sld [smem:[#allocation0]]
  $region46: #{tpu_custom_call.1} parent=0
    _
  %s12 = ssub.s32 1, %s10
  %s13 = scalar_select 0, %s12, %s10
  %v14 = vstv %s8
  %15 = vst [vmem:[#allocation2] sm:$0x1] %v14
  // Predicated region
  $region2: #{tpu_custom_call.1} parent=0 // pred_check
    _
  $region3: #{tpu_custom_call.1} parent=0 // pred_check_branch
    %17 = sbr.rel (0) target = $region5
  $region4: #{tpu_custom_call.1} parent=0 // pred_region
    _
  $region5: #{tpu_custom_call.1} parent=0 // pred_fallthru
    _
  // Predicated region
  $region6: #{tpu_custom_call.1} parent=0 // pred_check
    _
  $region7: #{tpu_custom_call.1} parent=0 // pred_check_branch
    %19 = sbr.rel (0) target = $region9
  $region8: #{tpu_custom_call.1} parent=0 // pred_region
    _
  $region9: #{tpu_custom_call.1} parent=0 // pred_fallthru
    _
  // Predicated region
  $region10: #{tpu_custom_call.1} parent=0 // pred_check
    _
  $region11: #{tpu_custom_call.1} parent=0 // pred_check_branch
    %21 = sbr.rel (0) target = $region13
  $region12: #{tpu_custom_call.1} parent=0 // pred_region
    _
  $region13: #{tpu_custom_call.1} parent=0 // pred_fallthru
    _
  // Predicated region
  $region14: #{tpu_custom_call.1} parent=0 // pred_check
    _
  $region15: #{tpu_custom_call.1} parent=0 // pred_check_branch
    %23 = sbr.rel (0) target = $region17
  $region16: #{tpu_custom_call.1} parent=0 // pred_region
    _
  $region17: #{tpu_custom_call.1} parent=0 // pred_fallthru
    _
  // Predicated region
  $region18: #{tpu_custom_call.1} parent=0 // pred_check
    _
  $region19: #{tpu_custom_call.1} parent=0 // pred_check_branch
    %25 = sbr.rel (0) target = $region21
  $region20: #{tpu_custom_call.1} parent=0 // pred_region
    _
  $region21: #{tpu_custom_call.1} parent=0 // pred_fallthru
    _
  // Predicated region
  $region22: #{tpu_custom_call.1} parent=0 // pred_check
    _
  $region23: #{tpu_custom_call.1} parent=0 // pred_check_branch
    %27 = sbr.rel (0) target = $region25
  $region24: #{tpu_custom_call.1} parent=0 // pred_region
    _
  $region25: #{tpu_custom_call.1} parent=0 // pred_fallthru
    _
  // Predicated region
  $region26: #{tpu_custom_call.1} parent=0 // pred_check
    _
  $region27: #{tpu_custom_call.1} parent=0 // pred_check_branch
    %29 = sbr.rel (0) target = $region29
  $region28: #{tpu_custom_call.1} parent=0 // pred_region
    _
  $region29: #{tpu_custom_call.1} parent=0 // pred_fallthru
    _
  // Predicated region
  $region30: #{tpu_custom_call.1} parent=0 // pred_check
    _
  $region31: #{tpu_custom_call.1} parent=0 // pred_check_branch
    %31 = sbr.rel (0) target = $region33
  $region32: #{tpu_custom_call.1} parent=0 // pred_region
    _
  $region33: #{tpu_custom_call.1} parent=0 // pred_fallthru
    _
  // Predicated region
  $region34: #{tpu_custom_call.1} parent=0 // pred_check
    _
  $region35: #{tpu_custom_call.1} parent=0 // pred_check_branch
    %33 = sbr.rel (0) target = $region37
  $region36: #{tpu_custom_call.1} parent=0 // pred_region
    _
  $region37: #{tpu_custom_call.1} parent=0 // pred_fallthru
    _
  %v35 = vld [vmem:[%s0] sm:$0xf]
  %v36 = vld [vmem:[%s0 + $0x4] sm:$0xf]
  %v37 = vld [vmem:[%s1] sm:$0xf]
  %v38 = vld [vmem:[%s1 + $0x4] sm:$0xf]
  %v39 = vld [vmem:[%s1 + $0x8] sm:$0xf]
  %v40 = vld [vmem:[%s1 + $0xc] sm:$0xf]
  %v41 = vld [vmem:[%s2] sm:$0x1]
  %v43 = vlaneseq
  %v44 = vshrl.u32 %v43, 7
  %v45 = vsub.s32 0, %v44
  %v46 = vrot.slane %v41, %v45
  %v50 = vunpack.c.l.b16 %v35
  %v51 = vunpack.c.l.b16 %v36
  %v52 = vpack.c.b16 %v51, %v50
  %v57 = vunpack.c.l.b16 %v37
  %v58 = vunpack.c.l.b16 %v38
  %v59 = vunpack.c.l.b16 %v39
  %v60 = vunpack.c.l.b16 %v40
  %v61 = vpack.c.b16 %v58, %v57
  %v62 = vpack.c.b16 %v60, %v59
  %vm64 = vcmask 252928
  %v66 = vsel %vm64, %v52, 0
  %vm68 = vcmask 1046528
  %vm69 = vcmask 1047552
  %v70 = vsel %vm68, 4294967295, 65535
  %v71 = vsel %vm69, %v70, 0
  %v73 = vand.u32 %v62, %v71
  %75 = vmatprep.subr.bf16.mxu0 0
  %76 = vmatpush1.bf16.msra.mxu0 %v61
  %77 = vmatprep.subr.bf16.mxu0 0
  %78 = vmatpush1.bf16.msra.mxu0 %v73
  %79 = vmatprep.subr.bf16.mxu0 0
  %80 = vmatpush1.bf16.msra.mxu0 0
  %81 = vmatprep.subr.bf16.mxu0 0
  %82 = vmatpush1.bf16.msra.mxu0 0
  %83 = vmatprep.subr.bf16.mxu0 0
  %84 = vmatpush1.bf16.msra.mxu0 0
  %85 = vmatprep.subr.bf16.mxu0 0
  %86 = vmatpush1.bf16.msra.mxu0 0
  %87 = vmatprep.subr.bf16.mxu0 0
  %88 = vmatpush1.bf16.msra.mxu0 0
  %89 = vmatprep.subr.bf16.mxu0 0
  %90 = vmatpush1.bf16.msra.mxu0 0
  %91 = vmatprep.subr.bf16.mxu0 0
  %92 = vmatpush1.bf16.msra.mxu0 0
  %93 = vmatprep.subr.bf16.mxu0 0
  %94 = vmatpush1.bf16.msra.mxu0 0
  %95 = vmatprep.subr.bf16.mxu0 0
  %96 = vmatpush1.bf16.msra.mxu0 0
  %97 = vmatprep.subr.bf16.mxu0 0
  %98 = vmatpush1.bf16.msra.mxu0 0
  %99 = vmatprep.subr.bf16.mxu0 0
  %100 = vmatpush1.bf16.msra.mxu0 0
  %101 = vmatprep.subr.bf16.mxu0 0
  %102 = vmatpush1.bf16.msra.mxu0 0
  %103 = vmatprep.subr.bf16.mxu0 0
  %104 = vmatpush1.bf16.msra.mxu0 0
  %105 = vmatprep.subr.bf16.mxu0 0
  %106 = vmatpush1.bf16.msra.mxu0 0
  %107 = vmatprep.mubr.bf16.mxu0 0
  %108 = vmatmul.mubr.bf16.gmra.mrb[0].mxu0 %v66
  %v109 = vpop.f32.mrb[0].mxu0
  %v110 = vadd.f32 %v46, %v109
  %v111 = vpop.f32.mrb[0].mxu0
  %v112 = vpop.f32.mrb[0].mxu0
  %v113 = vadd.f32 %v46, %v112
  %v114 = vpop.f32.mrb[0].mxu0
  %115 = vdwg.mxu0
  %v116 = vmax.f32 %v110, 0.0
  %v117 = vmax.f32 %v113, 0.0
  %v118 = vpack.c.bf16 %v117, %v116
  %v119 = vld [vmem:[%s3] sm:$0xf]
  %v120 = vld [vmem:[%s3 + $0x4] sm:$0xf]
  %v121 = vld [vmem:[%s3 + $0x8] sm:$0xf]
  %v122 = vld [vmem:[%s3 + $0xc] sm:$0xf]
  %v123 = vld [vmem:[%s3 + $0x10] sm:$0xf]
  %v124 = vld [vmem:[%s3 + $0x14] sm:$0xf]
  %v125 = vld [vmem:[%s3 + $0x18] sm:$0xf]
  %v126 = vld [vmem:[%s3 + $0x1c] sm:$0xf]
  %v127 = vld [vmem:[%s3 + $0x20] sm:$0xf]
  %v128 = vld [vmem:[%s3 + $0x24] sm:$0xf]
  %v129 = vld [vmem:[%s3 + $0x28] sm:$0xf]
  %v130 = vld [vmem:[%s3 + $0x2c] sm:$0xf]
  %v131 = vld [vmem:[%s3 + $0x30] sm:$0x3]
  %v132 = vld [vmem:[%s4] sm:$0x1]
  %v134 = vlaneseq
  %v135 = vshrl.u32 %v134, 7
  %v136 = vsub.s32 0, %v135
  %v137 = vrot.slane %v132, %v136
  %v152 = vunpack.c.l.b16 %v119
  %v153 = vunpack.c.l.b16 %v120
  %v154 = vunpack.c.l.b16 %v121
  %v155 = vunpack.c.l.b16 %v122
  %v156 = vunpack.c.l.b16 %v123
  %v157 = vunpack.c.l.b16 %v124
  %v158 = vunpack.c.l.b16 %v125
  %v159 = vunpack.c.l.b16 %v126
  %v160 = vunpack.c.l.b16 %v127
  %v161 = vunpack.c.l.b16 %v128
  %v162 = vunpack.c.l.b16 %v129
  %v163 = vunpack.c.l.b16 %v130
  %v164 = vunpack.c.l.b16 %v131
  %v165 = vpack.c.b16 %v153, %v152
  %v166 = vpack.c.b16 %v155, %v154
  %v167 = vpack.c.b16 %v157, %v156
  %v168 = vpack.c.b16 %v159, %v158
  %v169 = vpack.c.b16 %v161, %v160
  %v170 = vpack.c.b16 %v163, %v162
  %v171 = vpack.c.b16 %v164, %v164
  %vm178 = vcmask 818176
  %v180 = vsel %vm178, %v118, 0
  %vm182 = vcmask 1041408
  %v184 = vsel %vm182, %v171, 0
  %186 = vmatprep.subr.bf16.mxu0 0
  %187 = vmatpush1.bf16.msra.mxu0 %v165
  %188 = vmatprep.subr.bf16.mxu0 0
  %189 = vmatpush1.bf16.msra.mxu0 %v166
  %190 = vmatprep.subr.bf16.mxu0 0
  %191 = vmatpush1.bf16.msra.mxu0 %v167
  %192 = vmatprep.subr.bf16.mxu0 0
  %193 = vmatpush1.bf16.msra.mxu0 %v168
  %194 = vmatprep.subr.bf16.mxu0 0
  %195 = vmatpush1.bf16.msra.mxu0 %v169
  %196 = vmatprep.subr.bf16.mxu0 0
  %197 = vmatpush1.bf16.msra.mxu0 %v170
  %198 = vmatprep.subr.bf16.mxu0 0
  %199 = vmatpush1.bf16.msra.mxu0 %v184
  %200 = vmatprep.subr.bf16.mxu0 0
  %201 = vmatpush1.bf16.msra.mxu0 0
  %202 = vmatprep.subr.bf16.mxu0 0
  %203 = vmatpush1.bf16.msra.mxu0 0
  %204 = vmatprep.subr.bf16.mxu0 0
  %205 = vmatpush1.bf16.msra.mxu0 0
  %206 = vmatprep.subr.bf16.mxu0 0
  %207 = vmatpush1.bf16.msra.mxu0 0
  %208 = vmatprep.subr.bf16.mxu0 0
  %209 = vmatpush1.bf16.msra.mxu0 0
  %210 = vmatprep.subr.bf16.mxu0 0
  %211 = vmatpush1.bf16.msra.mxu0 0
  %212 = vmatprep.subr.bf16.mxu0 0
  %213 = vmatpush1.bf16.msra.mxu0 0
  %214 = vmatprep.subr.bf16.mxu0 0
  %215 = vmatpush1.bf16.msra.mxu0 0
  %216 = vmatprep.subr.bf16.mxu0 0
  %217 = vmatpush1.bf16.msra.mxu0 0
  %218 = vmatprep.mubr.bf16.mxu0 0
  %219 = vmatmul.mubr.bf16.gmra.mrb[0].mxu0 %v180
  %v220 = vpop.f32.mrb[0].mxu0
  %v221 = vadd.f32 %v137, %v220
  %v222 = vpop.f32.mrb[0].mxu0
  %v223 = vpop.f32.mrb[0].mxu0
  %v224 = vadd.f32 %v137, %v223
  %v225 = vpop.f32.mrb[0].mxu0
  %226 = vdwg.mxu0
  %v227 = vmax.f32 %v221, 0.0
  %v228 = vmax.f32 %v224, 0.0
  %v229 = vpack.c.bf16 %v228, %v227
  %v230 = vld [vmem:[%s5] sm:$0xf]
  %v231 = vld [vmem:[%s5 + $0x4] sm:$0xf]
  %v232 = vld [vmem:[%s5 + $0x8] sm:$0xf]
  %v233 = vld [vmem:[%s5 + $0xc] sm:$0xf]
  %v234 = vld [vmem:[%s5 + $0x10] sm:$0xf]
  %v235 = vld [vmem:[%s5 + $0x14] sm:$0xf]
  %v236 = vld [vmem:[%s5 + $0x18] sm:$0x1]
  %v237 = vld [vmem:[%s6] sm:$0x1]
  %v239 = vlaneseq
  %v240 = vshrl.u32 %v239, 7
  %v241 = vsub.s32 0, %v240
  %v242 = vrot.slane %v237, %v241
  %v251 = vunpack.c.l.b16 %v230
  %v252 = vunpack.c.l.b16 %v231
  %v253 = vunpack.c.l.b16 %v232
  %v254 = vunpack.c.l.b16 %v233
  %v255 = vunpack.c.l.b16 %v234
  %v256 = vunpack.c.l.b16 %v235
  %v257 = vunpack.c.l.b16 %v236
  %v258 = vpack.c.b16 %v252, %v251
  %v259 = vpack.c.b16 %v254, %v253
  %v260 = vpack.c.b16 %v256, %v255
  %v261 = vpack.c.b16 %v257, %v257
  %vm265 = vcmask 408576
  %v267 = vsel %vm265, %v229, 0
  %vm269 = vcmask 1040384
  %v271 = vsel %vm269, %v261, 0
  %273 = vmatprep.subr.bf16.mxu0 0
  %274 = vmatpush1.bf16.msra.mxu0 %v258
  %275 = vmatprep.subr.bf16.mxu0 0
  %276 = vmatpush1.bf16.msra.mxu0 %v259
  %277 = vmatprep.subr.bf16.mxu0 0
  %278 = vmatpush1.bf16.msra.mxu0 %v260
  %279 = vmatprep.subr.bf16.mxu0 0
  %280 = vmatpush1.bf16.msra.mxu0 %v271
  %281 = vmatprep.subr.bf16.mxu0 0
  %282 = vmatpush1.bf16.msra.mxu0 0
  %283 = vmatprep.subr.bf16.mxu0 0
  %284 = vmatpush1.bf16.msra.mxu0 0
  %285 = vmatprep.subr.bf16.mxu0 0
  %286 = vmatpush1.bf16.msra.mxu0 0
  %287 = vmatprep.subr.bf16.mxu0 0
  %288 = vmatpush1.bf16.msra.mxu0 0
  %289 = vmatprep.subr.bf16.mxu0 0
  %290 = vmatpush1.bf16.msra.mxu0 0
  %291 = vmatprep.subr.bf16.mxu0 0
  %292 = vmatpush1.bf16.msra.mxu0 0
  %293 = vmatprep.subr.bf16.mxu0 0
  %294 = vmatpush1.bf16.msra.mxu0 0
  %295 = vmatprep.subr.bf16.mxu0 0
  %296 = vmatpush1.bf16.msra.mxu0 0
  %297 = vmatprep.subr.bf16.mxu0 0
  %298 = vmatpush1.bf16.msra.mxu0 0
  %299 = vmatprep.subr.bf16.mxu0 0
  %300 = vmatpush1.bf16.msra.mxu0 0
  %301 = vmatprep.subr.bf16.mxu0 0
  %302 = vmatpush1.bf16.msra.mxu0 0
  %303 = vmatprep.subr.bf16.mxu0 0
  %304 = vmatpush1.bf16.msra.mxu0 0
  %305 = vmatprep.mubr.bf16.mxu0 0
  %306 = vmatmul.mubr.bf16.gmra.mrb[0].mxu0 %v267
  %v307 = vpop.f32.mrb[0].mxu0
  %v308 = vadd.f32 %v242, %v307
  %v309 = vpop.f32.mrb[0].mxu0
  %v310 = vpop.f32.mrb[0].mxu0
  %v311 = vadd.f32 %v242, %v310
  %v312 = vpop.f32.mrb[0].mxu0
  %313 = vdwg.mxu0
  %v314 = vmax.f32 %v308, 0.0
  %v315 = vmax.f32 %v311, 0.0
  %v316 = vld [vmem:[%s7] sm:$0x1]
  %v318 = vlaneseq
  %v319 = vshrl.u32 %v318, 7
  %v320 = vsub.s32 0, %v319
  %v321 = vrot.slane %v316, %v320
  %v323 = vmul.f32 %v314, %v321
  %v324 = vmul.f32 %v315, %v321
  %vm325 = vcmask 162816
  %v326 = vsel %vm325, %v323, 0.0
  %327 = vadd.xlane.f32.xlu0 %v326
  %v328 = vpop.xlane.xlu0 %327
  %v329 = vsel %vm325, %v324, 0.0
  %330 = vadd.xlane.f32.xlu0 %v329
  %v331 = vpop.xlane.xlu0 %330
  %v332 = vld [vmem:[#allocation2] sm:$0x1]
  %v334 = vlaneseq
  %v335 = vshrl.u32 %v334, 7
  %v336 = vsub.s32 0, %v335
  %v337 = vrot.slane %v332, %v336
  %v339 = vadd.f32 %v328, %v337
  %v340 = vadd.f32 %v331, %v337
  %v341 = vsub.f32 0.0, %v339
  %v342 = vsub.f32 0.0, %v340
  %v343 = vmul.f32 %v341, 1.442695
  %v344 = vpow.pop %v343
  %v345 = vmul.f32 %v342, 1.442695
  %v346 = vpow.pop %v345
  %v347 = vadd.f32 %v344, 1.0
  %v348 = vadd.f32 %v346, 1.0
  %v349 = vrcp.pop %v347
  %v350 = vrcp.pop %v348
  %v351 = vlaneseq
  %v352 = vand.u32 %v351, 127
  %vm353 = vcmp.eq.s32.totalorder %v352, 0
  %355 = vset.pattern.permute.xlu0 0
  %356 = vperm.xlu0 %355, %v339
  %v357 = vpop.permute.xlu0 %356
  %360 = vset.pattern.permute.xlu0 0
  %361 = vperm.xlu0 %360, %v340
  %v362 = vpop.permute.xlu0 %361
  %365 = vset.pattern.permute.xlu0 0
  %366 = vperm.xlu0 %365, %v349
  %v367 = vpop.permute.xlu0 %366
  %370 = vset.pattern.permute.xlu0 0
  %371 = vperm.xlu0 %370, %v350
  %v372 = vpop.permute.xlu0 %371
  %v374 = vsel %vm353, %v357, %v367
  %v375 = vsel %vm353, %v362, %v372
  %vm376 = vcmask 15360
  %377 = vst.msk [vmem:[%s9] sm:$0xff] %vm376, %v374
  %378 = vst.msk [vmem:[%s9 + $0x8] sm:$0xff] %vm376, %v375
  // Predicated region
  $region38: #{tpu_custom_call.1} parent=0 // pred_check
    _
  $region39: #{tpu_custom_call.1} parent=0 // pred_check_branch
    %380 = sbr.rel (0) target = $region41
  $region40: #{tpu_custom_call.1} parent=0 // pred_region
    _
  $region41: #{tpu_custom_call.1} parent=0 // pred_fallthru
    _
  // Predicated region
  $region42: #{tpu_custom_call.1} parent=0 // pred_check
    _
  $region43: #{tpu_custom_call.1} parent=0 // pred_check_branch
    %382 = sbr.rel (0) target = $region45
  $region44: #{tpu_custom_call.1} parent=0 // pred_region
    _
  $region45: #{tpu_custom_call.1} parent=0 // pred_fallthru
    _

</llo_original>
